<compile_context>
chip_gen: v5e
topology: v5e:2x2
jax: 0.10.0
libtpu: 0.0.40
codegen_flags: <defaults>
</compile_context>

<pallas_src>
import functools

import jax
import jax.numpy as jnp
from jax.experimental import pallas as pl
from jax.experimental.pallas import tpu as pltpu

EPS = 1e-5
_VMEM_BUDGET = 48 * 1024 * 1024   # target double-buffered footprint (fits v7x 64 MiB / TC with slack)


def _round_up(x, m):
    return ((x + m - 1) // m) * m


# -------- Pass 1 (only Pallas pass): K-tiled packed complex matmul + per-channel sum / sumsq --------
def _matmul_stats_kernel(p_ref, w_ref, y_ref, stats_ref, acc_ref):
    # p_ref: (TM, TK)  w_ref: (TK, C_pad)  y_ref: (TM, C_pad) stash  stats: (1, 2, C_pad) f32
    @pl.when(pl.program_id(1) == 0)
    def _():
        acc_ref[...] = jnp.zeros_like(acc_ref)

    acc_ref[...] += jnp.dot(p_ref[...], w_ref[...], preferred_element_type=jnp.float32)

    @pl.when(pl.program_id(1) == pl.num_programs(1) - 1)
    def _():
        y = acc_ref[...]                                         # exact f32 accumulator
        y_ref[...] = y.astype(y_ref.dtype)                       # bf16 stash on the fast path
        stats_ref[0, 0:1, :] = jnp.sum(y, axis=0, keepdims=True)       # per-channel sum
        stats_ref[0, 1:2, :] = jnp.sum(y * y, axis=0, keepdims=True)   # per-channel sum of squares


def _im2col(x, kh, kw, stride, padding, dilation):
    # x: (N, C, H, W) -> (N*Ho*Wo, C*kh*kw), K ordered (C major, then kh, kw)
    x = jnp.pad(x, ((0, 0), (0, 0), (padding, padding), (padding, padding)))
    n, c, h, w = x.shape
    ho = (h - dilation * (kh - 1) - 1) // stride + 1
    wo = (w - dilation * (kw - 1) - 1) // stride + 1
    cols = []
    for i in range(kh):
        for j in range(kw):
            patch = x[:, :,
                      i * dilation: i * dilation + stride * ho: stride,
                      j * dilation: j * dilation + stride * wo: stride]
            cols.append(patch)                    # (N, C, Ho, Wo)
    cols = jnp.stack(cols, axis=2)                # (N, C, kh*kw, Ho, Wo)
    cols = cols.reshape(n, c * kh * kw, ho, wo)
    cols = cols.transpose(0, 2, 3, 1).reshape(n * ho * wo, c * kh * kw)
    return cols, ho, wo


@functools.partial(
    jax.jit,
    static_argnames=("stride", "padding", "dilation", "block_m", "block_k", "compute_dtype"))
def complex_single_conv_block(x, params, *, stride=1, padding=0, dilation=1,
                              block_m=1024, block_k=1024, compute_dtype=jnp.bfloat16):
    """x: (N, C_in, H, W, 2) float32 -> (N, C_out, H_out, W_out, 2) float32."""
    w_r, w_i, b_r, b_i, g_r, bt_r, g_i, bt_i = params
    # Conv biases unused: training-mode BN mean subtraction cancels them exactly.
    del b_r, b_i
    c_out, c_in, kh, kw = w_r.shape
    n = x.shape[0]
    k = c_in * kh * kw

    # Cast to compute dtype BEFORE im2col so the kh*kw-inflated patch matrix lives in bf16.
    x_ri = jnp.concatenate([x[..., 0], x[..., 1]], axis=1).astype(compute_dtype)  # (N, 2*C_in, H, W)
    p, ho, wo = _im2col(x_ri, kh, kw, stride, padding, dilation)                  # (M, 2K) compute dt
    m = p.shape[0]

    # Lane-dense padded shapes + tile sizing against the VMEM budget.
    k2p = _round_up(2 * k, 128)
    c2 = 2 * c_out
    cp = _round_up(c2, 128)
    dt_bytes = jnp.dtype(compute_dtype).itemsize

    tm = _round_up(min(block_m, _round_up(m, 16)), 16)
    tk = min(_round_up(block_k, 128), k2p)

    def _footprint(tm_):
        return (2 * tm_ * tk * dt_bytes      # patch tile, double-buffered
                + 2 * tk * cp * dt_bytes     # packed-weight tile, double-buffered
                + 2 * tm_ * cp * dt_bytes    # y stash tile, double-buffered
                + 2 * 2 * cp * 4             # stats tile
                + tm_ * cp * 4)              # f32 accumulator scratch

    while _footprint(tm) > _VMEM_BUDGET and tm > 256:
        tm = max(256, _round_up(tm // 2, 16))
    vmem_limit = int(min(max(_footprint(tm) + (8 << 20), 32 << 20), 100 << 20))

    m_pad = _round_up(m, tm)
    k2p_pad = _round_up(k2p, tk)
    n_tiles = m_pad // tm
    k_tiles = k2p_pad // tk

    p = jnp.pad(p, ((0, m_pad - m), (0, k2p_pad - 2 * k)))

    # Packed complex weight:  [Yr | Yi] = [Pr | Pi] @ [[Wr, Wi], [-Wi, Wr]]
    wr2 = w_r.reshape(c_out, k).T
    wi2 = w_i.reshape(c_out, k).T
    w_packed = jnp.concatenate(
        [jnp.concatenate([wr2, wi2], axis=1),
         jnp.concatenate([-wi2, wr2], axis=1)], axis=0)            # (2K, 2*C_out)
    w_packed = jnp.pad(
        w_packed, ((0, k2p_pad - 2 * k), (0, cp - c2))).astype(compute_dtype)

    # ---- K-tiled matmul: stash pre-BN y (compute dtype) + per-tile channel sum/sumsq (f32) ----
    y_pre, stats = pl.pallas_call(
        _matmul_stats_kernel,
        grid=(n_tiles, k_tiles),
        in_specs=[pl.BlockSpec((tm, tk), lambda i, kk: (i, kk)),
                  pl.BlockSpec((tk, cp), lambda i, kk: (kk, 0))],
        out_specs=(pl.BlockSpec((tm, cp), lambda i, kk: (i, 0)),
                   pl.BlockSpec((1, 2, cp), lambda i, kk: (i, 0, 0))),
        out_shape=(jax.ShapeDtypeStruct((m_pad, cp), compute_dtype),
                   jax.ShapeDtypeStruct((n_tiles, 2, cp), jnp.float32)),
        scratch_shapes=[pltpu.VMEM((tm, cp), jnp.float32)],
        compiler_params=pltpu.CompilerParams(
            dimension_semantics=("parallel", "arbitrary"),
            vmem_limit_bytes=vmem_limit),
    )(p, w_packed)

    # ---- Global training-mode BN statistics (biased variance); zero-padded rows add nothing. ----
    sums = jnp.sum(stats, axis=0)                                  # (2, cp)
    mean = sums[0, :c2] / m
    # TODO(synk): E[y^2]-E[y]^2 in f32 is cancellation-prone for huge M with large means; a per-tile
    #             centered (Welford-style) combine would be more robust.
    var = jnp.maximum(sums[1, :c2] / m - mean * mean, 0.0)
    rstd = jax.lax.rsqrt(var + EPS)
    gamma = jnp.concatenate([g_r, g_i]).astype(jnp.float32)
    beta = jnp.concatenate([bt_r, bt_i]).astype(jnp.float32)
    scale = gamma * rstd
    shift = beta - mean * scale

    # ---- Fused XLA epilogue: normalize + affine + ReLU + unpack + NCHW transpose (single read). ----
    y_val = y_pre[:m, :c2].astype(jnp.float32)
    y_val = jnp.maximum(y_val * scale[None, :] + shift[None, :], 0.0)
    y_val = y_val.reshape(n, ho, wo, c2)
    out = jnp.stack([y_val[..., :c_out], y_val[..., c_out:]], axis=-1)   # (N, Ho, Wo, C, 2)
    return out.transpose(0, 3, 1, 2, 4)


# ------------------------- pure-JAX reference (f32, with biases) -------------------------

def _ref_conv(x, w, b, stride, padding, dilation):
    y = jax.lax.conv_general_dilated(
        x, w, window_strides=(stride, stride),
        padding=[(padding, padding), (padding, padding)],
        rhs_dilation=(dilation, dilation),
        dimension_numbers=("NCHW", "OIHW", "NCHW"),
        precision=jax.lax.Precision.HIGHEST)
    return y + b[None, :, None, None]


def _ref_bn(y, gamma, beta):
    mean = jnp.mean(y, axis=(0, 2, 3), keepdims=True)
    var = jnp.mean(jnp.square(y - mean), axis=(0, 2, 3), keepdims=True)
    y_hat = (y - mean) * jax.lax.rsqrt(var + EPS)
    return y_hat * gamma[None, :, None, None] + beta[None, :, None, None]


def reference_block(x, params, *, stride=1, padding=0, dilation=1):
    w_r, w_i, b_r, b_i, g_r, bt_r, g_i, bt_i = params
    x_r, x_i = x[..., 0], x[..., 1]
    cr_r = _ref_conv(x_r, w_r, b_r, stride, padding, dilation)
    cr_i = _ref_conv(x_i, w_r, b_r, stride, padding, dilation)
    ci_r = _ref_conv(x_r, w_i, b_i, stride, padding, dilation)
    ci_i = _ref_conv(x_i, w_i, b_i, stride, padding, dilation)
    y_r = cr_r - ci_i
    y_i = cr_i + ci_r
    y_r = jnp.maximum(_ref_bn(y_r, g_r, bt_r), 0.0)
    y_i = jnp.maximum(_ref_bn(y_i, g_i, bt_i), 0.0)
    return jnp.stack((y_r, y_i), axis=-1)


if __name__ == "__main__":
    # Small shapes: batch=2, c_in=4, c_out=8, spatial=16x16, k_size=3, stride=1, padding=0
    N, C_IN, C_OUT, H, W, K = 2, 4, 8, 16, 16, 3

    key = jax.random.PRNGKey(0)
    k_x, k_wr, k_wi, k_br, k_bi = jax.random.split(key, 5)

    x = jax.random.normal(k_x, (N, C_IN, H, W, 2), dtype=jnp.float32)

    fan_in = C_IN * K * K
    bound = 1.0 / (fan_in ** 0.5)
    w_r = jax.random.uniform(k_wr, (C_OUT, C_IN, K, K), jnp.float32, -bound, bound)
    w_i = jax.random.uniform(k_wi, (C_OUT, C_IN, K, K), jnp.float32, -bound, bound)
    b_r = jax.random.uniform(k_br, (C_OUT,), jnp.float32, -bound, bound)
    b_i = jax.random.uniform(k_bi, (C_OUT,), jnp.float32, -bound, bound)
    # BatchNorm affine params at default init (gamma=1, beta=0) for both real and imag BNs.
    g_r = jnp.ones((C_OUT,), jnp.float32)
    bt_r = jnp.zeros((C_OUT,), jnp.float32)
    g_i = jnp.ones((C_OUT,), jnp.float32)
    bt_i = jnp.zeros((C_OUT,), jnp.float32)

    params = (w_r, w_i, b_r, b_i, g_r, bt_r, g_i, bt_i)

    ref = reference_block(x, params, stride=1, padding=0, dilation=1)

    # f32 path (patches, weights and y stash all f32): tight check against the f32 reference.
    out_f32 = complex_single_conv_block(x, params, stride=1, padding=0, dilation=1,
                                        compute_dtype=jnp.float32)
    out_f32 = jax.block_until_ready(out_f32)
    assert out_f32.shape == (N, C_OUT, H - K + 1, W - K + 1, 2), out_f32.shape
    assert jnp.allclose(out_f32, ref, atol=2e-4, rtol=2e-4), \
        float(jnp.max(jnp.abs(out_f32 - ref)))

    # bf16 fast path (MXU-native inputs + bf16 y stash): looser tolerance vs. the f32 reference.
    out_bf16 = complex_single_conv_block(x, params, stride=1, padding=0, dilation=1,
                                         compute_dtype=jnp.bfloat16)
    out_bf16 = jax.block_until_ready(out_bf16)
    assert out_bf16.shape == (N, C_OUT, H - K + 1, W - K + 1, 2), out_bf16.shape
    assert jnp.allclose(out_bf16, ref, atol=4e-2, rtol=4e-2), \
        float(jnp.max(jnp.abs(out_bf16 - ref)))

    print("KERNEL_OK")
</pallas_src>

<mosaic_0001>
module attributes {stable_mosaic.version = 11 : i64} {
  func.func @_matmul_stats_kernel(%arg0: i32, %arg1: i32, %arg2: memref<400x128xf32, #tpu.memory_space<vmem>>, %arg3: memref<128x128xf32, #tpu.memory_space<vmem>>, %arg4: memref<400x128xf32, #tpu.memory_space<vmem>>, %arg5: memref<1x2x128xf32, #tpu.memory_space<vmem>>, %arg6: memref<400x128xf32, #tpu.memory_space<vmem>>) attributes {dimension_semantics = [#tpu.dimension_semantics<parallel>, #tpu.dimension_semantics<arbitrary>], iteration_bounds = array<i64: 1, 1>, scalar_prefetch = 0 : i64, scratch_operands = 1 : i64, tpu.core_type = #tpu.core_type<tc>, window_params = [{transform_indices = @transform_0, window_bounds = array<i64: 400, 128>}, {transform_indices = @transform_1, window_bounds = array<i64: 128, 128>}, {transform_indices = @transform_2, window_bounds = array<i64: 400, 128>}, {transform_indices = @transform_3, window_bounds = array<i64: 1, 2, 128>}]} {
    %c0_i32 = arith.constant 0 : i32
    %0 = arith.cmpi eq, %arg1, %c0_i32 : i32
    %1 = arith.extui %0 : i1 to i32
    %c0_i32_0 = arith.constant 0 : i32
    %2 = arith.cmpi ne, %1, %c0_i32_0 : i32
    scf.if %2 {
      %cst_10 = arith.constant 0.000000e+00 : f32
      %12 = vector.broadcast %cst_10 : f32 to vector<400x128xf32>
      %c0_11 = arith.constant 0 : index
      %c0_12 = arith.constant 0 : index
      %13 = vector.load %arg6[%c0_11, %c0_12] : memref<400x128xf32, #tpu.memory_space<vmem>>, vector<400x128xf32>
      tpu.vector_store %arg6[%c0_11, %c0_12], %12 {strides = array<i32>} : memref<400x128xf32, #tpu.memory_space<vmem>>, vector<400x128xf32>,
    } else {
    }
    %c0 = arith.constant 0 : index
    %c0_1 = arith.constant 0 : index
    %3 = vector.load %arg6[%c0, %c0_1] : memref<400x128xf32, #tpu.memory_space<vmem>>, vector<400x128xf32>
    %c0_2 = arith.constant 0 : index
    %c0_3 = arith.constant 0 : index
    %4 = vector.load %arg2[%c0_2, %c0_3] : memref<400x128xf32, #tpu.memory_space<vmem>>, vector<400x128xf32>
    %c0_4 = arith.constant 0 : index
    %c0_5 = arith.constant 0 : index
    %5 = vector.load %arg3[%c0_4, %c0_5] : memref<128x128xf32, #tpu.memory_space<vmem>>, vector<128x128xf32>
    %cst = arith.constant dense<0.000000e+00> : vector<400x128xf32>
    %6 = tpu.matmul %4, %5, %cst {dimension_numbers = #tpu.dot_dimension_numbers<[1], [0], [0], [1], [0, 0, 1, 1], [], []>} : vector<400x128xf32>, vector<128x128xf32>, vector<400x128xf32> -> vector<400x128xf32>
    %7 = arith.addf %3, %6 : vector<400x128xf32>
    %c0_6 = arith.constant 0 : index
    %c0_7 = arith.constant 0 : index
    %8 = vector.load %arg6[%c0_6, %c0_7] : memref<400x128xf32, #tpu.memory_space<vmem>>, vector<400x128xf32>
    tpu.vector_store %arg6[%c0_6, %c0_7], %7 {strides = array<i32>} : memref<400x128xf32, #tpu.memory_space<vmem>>, vector<400x128xf32>,
    %c0_i32_8 = arith.constant 0 : i32
    %9 = arith.cmpi eq, %arg1, %c0_i32_8 : i32
    %10 = arith.extui %9 : i1 to i32
    %c0_i32_9 = arith.constant 0 : i32
    %11 = arith.cmpi ne, %10, %c0_i32_9 : i32
    scf.if %11 {
      %c0_10 = arith.constant 0 : index
      %c0_11 = arith.constant 0 : index
      %12 = vector.load %arg6[%c0_10, %c0_11] : memref<400x128xf32, #tpu.memory_space<vmem>>, vector<400x128xf32>
      %c0_12 = arith.constant 0 : index
      %c0_13 = arith.constant 0 : index
      %13 = vector.load %arg4[%c0_12, %c0_13] : memref<400x128xf32, #tpu.memory_space<vmem>>, vector<400x128xf32>
      tpu.vector_store %arg4[%c0_12, %c0_13], %12 {strides = array<i32>} : memref<400x128xf32, #tpu.memory_space<vmem>>, vector<400x128xf32>,
      %cst_14 = arith.constant dense<0.000000e+00> : vector<128xf32>
      %14 = vector.multi_reduction <add>, %12, %cst_14 [0] : vector<400x128xf32> to vector<128xf32>
      %15 = vector.shape_cast %14 : vector<128xf32> to vector<1x128xf32>
      %c0_15 = arith.constant 0 : index
      %c0_16 = arith.constant 0 : index
      %c0_17 = arith.constant 0 : index
      %16 = vector.load %arg5[%c0_15, %c0_16, %c0_17] : memref<1x2x128xf32, #tpu.memory_space<vmem>>, vector<1x1x128xf32>
      %17 = vector.shape_cast %16 : vector<1x1x128xf32> to vector<1x128xf32>
      %18 = vector.shape_cast %15 : vector<1x128xf32> to vector<1x1x128xf32>
      tpu.vector_store %arg5[%c0_15, %c0_16, %c0_17], %18 {strides = array<i32>} : memref<1x2x128xf32, #tpu.memory_space<vmem>>, vector<1x1x128xf32>,
      %19 = arith.mulf %12, %12 : vector<400x128xf32>
      %cst_18 = arith.constant dense<0.000000e+00> : vector<128xf32>
      %20 = vector.multi_reduction <add>, %19, %cst_18 [0] : vector<400x128xf32> to vector<128xf32>
      %21 = vector.shape_cast %20 : vector<128xf32> to vector<1x128xf32>
      %c0_19 = arith.constant 0 : index
      %c1 = arith.constant 1 : index
      %c0_20 = arith.constant 0 : index
      %22 = vector.load %arg5[%c0_19, %c1, %c0_20] : memref<1x2x128xf32, #tpu.memory_space<vmem>>, vector<1x1x128xf32>
      %23 = vector.shape_cast %22 : vector<1x1x128xf32> to vector<1x128xf32>
      %24 = vector.shape_cast %21 : vector<1x128xf32> to vector<1x1x128xf32>
      tpu.vector_store %arg5[%c0_19, %c1, %c0_20], %24 {strides = array<i32>} : memref<1x2x128xf32, #tpu.memory_space<vmem>>, vector<1x1x128xf32>,
    } else {
    }
    return
  }
  func.func @transform_0(%arg0: i32, %arg1: i32) -> (i32, i32) {
    %c0_i32 = arith.constant 0 : i32
    return %arg0, %arg1 : i32, i32
  }
  func.func @transform_1(%arg0: i32, %arg1: i32) -> (i32, i32) {
    %c0_i32 = arith.constant 0 : i32
    %c0_i32_0 = arith.constant 0 : i32
    return %arg1, %c0_i32 : i32, i32
  }
  func.func @transform_2(%arg0: i32, %arg1: i32) -> (i32, i32) {
    %c0_i32 = arith.constant 0 : i32
    %c0_i32_0 = arith.constant 0 : i32
    return %arg0, %c0_i32 : i32, i32
  }
  func.func @transform_3(%arg0: i32, %arg1: i32) -> (i32, i32, i32) {
    %c0_i32 = arith.constant 0 : i32
    %c0_i32_0 = arith.constant 0 : i32
    %c0_i32_1 = arith.constant 0 : i32
    return %arg0, %c0_i32, %c0_i32_0 : i32, i32, i32
  }
}

</mosaic_0001>

<llo_original>
// kernel: complex_single_conv_block.1
$region0: #{complex_single_conv_block.1}
  #allocation0 [shape = 'u32[]', space=smem, size = 0x4, offset = 0x4, fixed_abs, tag = 'smem constant byte address 0x4 - core index']
  #allocation1 [shape = 'u32[72,128]{1,0:T(1,128)}', space=vmem, size = 0x9000, scoped, tag = 'internal scratch']
  #allocation2 [shape = 'f32[400,128]{1,0:T(8,128)}', space=vmem, size = 0x32000, scoped, tag = 'scratch operand']
  %s0 = inlined_call_operand.vmem [shape: f32[400,128], index: 0, kind: input, shape index: {}]
  %s1 = inlined_call_operand.vmem [shape: f32[128,128], index: 1, kind: input, shape index: {}]
  %s2 = inlined_call_operand.vmem [shape: f32[400,128], index: 2, kind: output, shape index: {0}]
  %s3 = inlined_call_operand.vmem [shape: f32[1,2,128], index: 3, kind: output, shape index: {1}]
  %4 = xla_tuple %s2, %s3
  %s5 = sld [smem:[#allocation0]]
  $region34: #{complex_single_conv_block.1} parent=0
    _
  %s7 = ssub.s32 1, %s5
  %s8 = scalar_select 0, %s7, %s5
  // Predicated region
  $region2: #{complex_single_conv_block.1} parent=0 // pred_check
    _
  $region3: #{complex_single_conv_block.1} parent=0 // pred_check_branch
    %10 = sbr.rel (0) target = $region5
  $region4: #{complex_single_conv_block.1} parent=0 // pred_region
    _
  $region5: #{complex_single_conv_block.1} parent=0 // pred_fallthru
    _
  // Predicated region
  $region6: #{complex_single_conv_block.1} parent=0 // pred_check
    _
  $region7: #{complex_single_conv_block.1} parent=0 // pred_check_branch
    %12 = sbr.rel (0) target = $region9
  $region8: #{complex_single_conv_block.1} parent=0 // pred_region
    _
  $region9: #{complex_single_conv_block.1} parent=0 // pred_fallthru
    _
  %p13 = scmp.eq.s32.totalorder 0, 0
  // Predicated region
  $region10: #{complex_single_conv_block.1} parent=0 // pred_check
    %p14 = pneg %p13
  $region11: #{complex_single_conv_block.1} parent=0 // pred_check_branch
    %16 = sbr.rel (%p14) target = $region13
  $region12: #{complex_single_conv_block.1} parent=0 // pred_region
    %17 = vst [vmem:[#allocation2] sm:$0xff] 0.0
    %18 = vst [vmem:[#allocation2 + $0x8] sm:$0xff] 0.0
    %19 = vst [vmem:[#allocation2 + $0x10] sm:$0xff] 0.0
    %20 = vst [vmem:[#allocation2 + $0x18] sm:$0xff] 0.0
    %21 = vst [vmem:[#allocation2 + $0x20] sm:$0xff] 0.0
    %22 = vst [vmem:[#allocation2 + $0x28] sm:$0xff] 0.0
    %23 = vst [vmem:[#allocation2 + $0x30] sm:$0xff] 0.0
    %24 = vst [vmem:[#allocation2 + $0x38] sm:$0xff] 0.0
    %25 = vst [vmem:[#allocation2 + $0x40] sm:$0xff] 0.0
    %26 = vst [vmem:[#allocation2 + $0x48] sm:$0xff] 0.0
    %27 = vst [vmem:[#allocation2 + $0x50] sm:$0xff] 0.0
    %28 = vst [vmem:[#allocation2 + $0x58] sm:$0xff] 0.0
    %29 = vst [vmem:[#allocation2 + $0x60] sm:$0xff] 0.0
    %30 = vst [vmem:[#allocation2 + $0x68] sm:$0xff] 0.0
    %31 = vst [vmem:[#allocation2 + $0x70] sm:$0xff] 0.0
    %32 = vst [vmem:[#allocation2 + $0x78] sm:$0xff] 0.0
    %33 = vst [vmem:[#allocation2 + $0x80] sm:$0xff] 0.0
    %34 = vst [vmem:[#allocation2 + $0x88] sm:$0xff] 0.0
    %35 = vst [vmem:[#allocation2 + $0x90] sm:$0xff] 0.0
    %36 = vst [vmem:[#allocation2 + $0x98] sm:$0xff] 0.0
    %37 = vst [vmem:[#allocation2 + $0xa0] sm:$0xff] 0.0
    %38 = vst [vmem:[#allocation2 + $0xa8] sm:$0xff] 0.0
    %39 = vst [vmem:[#allocation2 + $0xb0] sm:$0xff] 0.0
    %40 = vst [vmem:[#allocation2 + $0xb8] sm:$0xff] 0.0
    %41 = vst [vmem:[#allocation2 + $0xc0] sm:$0xff] 0.0
    %42 = vst [vmem:[#allocation2 + $0xc8] sm:$0xff] 0.0
    %43 = vst [vmem:[#allocation2 + $0xd0] sm:$0xff] 0.0
    %44 = vst [vmem:[#allocation2 + $0xd8] sm:$0xff] 0.0
    %45 = vst [vmem:[#allocation2 + $0xe0] sm:$0xff] 0.0
    %46 = vst [vmem:[#allocation2 + $0xe8] sm:$0xff] 0.0
    %47 = vst [vmem:[#allocation2 + $0xf0] sm:$0xff] 0.0
    %48 = vst [vmem:[#allocation2 + $0xf8] sm:$0xff] 0.0
    %49 = vst [vmem:[#allocation2 + $0x100] sm:$0xff] 0.0
    %50 = vst [vmem:[#allocation2 + $0x108] sm:$0xff] 0.0
    %51 = vst [vmem:[#allocation2 + $0x110] sm:$0xff] 0.0
    %52 = vst [vmem:[#allocation2 + $0x118] sm:$0xff] 0.0
    %53 = vst [vmem:[#allocation2 + $0x120] sm:$0xff] 0.0
    %54 = vst [vmem:[#allocation2 + $0x128] sm:$0xff] 0.0
    %55 = vst [vmem:[#allocation2 + $0x130] sm:$0xff] 0.0
    %56 = vst [vmem:[#allocation2 + $0x138] sm:$0xff] 0.0
    %57 = vst [vmem:[#allocation2 + $0x140] sm:$0xff] 0.0
    %58 = vst [vmem:[#allocation2 + $0x148] sm:$0xff] 0.0
    %59 = vst [vmem:[#allocation2 + $0x150] sm:$0xff] 0.0
    %60 = vst [vmem:[#allocation2 + $0x158] sm:$0xff] 0.0
    %61 = vst [vmem:[#allocation2 + $0x160] sm:$0xff] 0.0
    %62 = vst [vmem:[#allocation2 + $0x168] sm:$0xff] 0.0
    %63 = vst [vmem:[#allocation2 + $0x170] sm:$0xff] 0.0
    %64 = vst [vmem:[#allocation2 + $0x178] sm:$0xff] 0.0
    %65 = vst [vmem:[#allocation2 + $0x180] sm:$0xff] 0.0
    %66 = vst [vmem:[#allocation2 + $0x188] sm:$0xff] 0.0
  $region13: #{complex_single_conv_block.1} parent=0 // pred_fallthru
    _
  %v67 = vld [vmem:[#allocation2] sm:$0xff]
  %v68 = vld [vmem:[#allocation2 + $0x8] sm:$0xff]
  %v69 = vld [vmem:[#allocation2 + $0x10] sm:$0xff]
  %v70 = vld [vmem:[#allocation2 + $0x18] sm:$0xff]
  %v71 = vld [vmem:[#allocation2 + $0x20] sm:$0xff]
  %v72 = vld [vmem:[#allocation2 + $0x28] sm:$0xff]
  %v73 = vld [vmem:[#allocation2 + $0x30] sm:$0xff]
  %v74 = vld [vmem:[#allocation2 + $0x38] sm:$0xff]
  %v75 = vld [vmem:[#allocation2 + $0x40] sm:$0xff]
  %v76 = vld [vmem:[#allocation2 + $0x48] sm:$0xff]
  %v77 = vld [vmem:[#allocation2 + $0x50] sm:$0xff]
  %v78 = vld [vmem:[#allocation2 + $0x58] sm:$0xff]
  %v79 = vld [vmem:[#allocation2 + $0x60] sm:$0xff]
  %v80 = vld [vmem:[#allocation2 + $0x68] sm:$0xff]
  %v81 = vld [vmem:[#allocation2 + $0x70] sm:$0xff]
  %v82 = vld [vmem:[#allocation2 + $0x78] sm:$0xff]
  %v83 = vld [vmem:[#allocation2 + $0x80] sm:$0xff]
  %v84 = vld [vmem:[#allocation2 + $0x88] sm:$0xff]
  %v85 = vld [vmem:[#allocation2 + $0x90] sm:$0xff]
  %v86 = vld [vmem:[#allocation2 + $0x98] sm:$0xff]
  %v87 = vld [vmem:[#allocation2 + $0xa0] sm:$0xff]
  %v88 = vld [vmem:[#allocation2 + $0xa8] sm:$0xff]
  %v89 = vld [vmem:[#allocation2 + $0xb0] sm:$0xff]
  %v90 = vld [vmem:[#allocation2 + $0xb8] sm:$0xff]
  %v91 = vld [vmem:[#allocation2 + $0xc0] sm:$0xff]
  %v92 = vld [vmem:[#allocation2 + $0xc8] sm:$0xff]
  %v93 = vld [vmem:[#allocation2 + $0xd0] sm:$0xff]
  %v94 = vld [vmem:[#allocation2 + $0xd8] sm:$0xff]
  %v95 = vld [vmem:[#allocation2 + $0xe0] sm:$0xff]
  %v96 = vld [vmem:[#allocation2 + $0xe8] sm:$0xff]
  %v97 = vld [vmem:[#allocation2 + $0xf0] sm:$0xff]
  %v98 = vld [vmem:[#allocation2 + $0xf8] sm:$0xff]
  %v99 = vld [vmem:[#allocation2 + $0x100] sm:$0xff]
  %v100 = vld [vmem:[#allocation2 + $0x108] sm:$0xff]
  %v101 = vld [vmem:[#allocation2 + $0x110] sm:$0xff]
  %v102 = vld [vmem:[#allocation2 + $0x118] sm:$0xff]
  %v103 = vld [vmem:[#allocation2 + $0x120] sm:$0xff]
  %v104 = vld [vmem:[#allocation2 + $0x128] sm:$0xff]
  %v105 = vld [vmem:[#allocation2 + $0x130] sm:$0xff]
  %v106 = vld [vmem:[#allocation2 + $0x138] sm:$0xff]
  %v107 = vld [vmem:[#allocation2 + $0x140] sm:$0xff]
  %v108 = vld [vmem:[#allocation2 + $0x148] sm:$0xff]
  %v109 = vld [vmem:[#allocation2 + $0x150] sm:$0xff]
  %v110 = vld [vmem:[#allocation2 + $0x158] sm:$0xff]
  %v111 = vld [vmem:[#allocation2 + $0x160] sm:$0xff]
  %v112 = vld [vmem:[#allocation2 + $0x168] sm:$0xff]
  %v113 = vld [vmem:[#allocation2 + $0x170] sm:$0xff]
  %v114 = vld [vmem:[#allocation2 + $0x178] sm:$0xff]
  %v115 = vld [vmem:[#allocation2 + $0x180] sm:$0xff]
  %v116 = vld [vmem:[#allocation2 + $0x188] sm:$0xff]
  %v117 = vld [vmem:[%s0] sm:$0xff]
  %v118 = vld [vmem:[%s0 + $0x8] sm:$0xff]
  %v119 = vld [vmem:[%s0 + $0x10] sm:$0xff]
  %v120 = vld [vmem:[%s0 + $0x18] sm:$0xff]
  %v121 = vld [vmem:[%s0 + $0x20] sm:$0xff]
  %v122 = vld [vmem:[%s0 + $0x28] sm:$0xff]
  %v123 = vld [vmem:[%s0 + $0x30] sm:$0xff]
  %v124 = vld [vmem:[%s0 + $0x38] sm:$0xff]
  %v125 = vld [vmem:[%s0 + $0x40] sm:$0xff]
  %v126 = vld [vmem:[%s0 + $0x48] sm:$0xff]
  %v127 = vld [vmem:[%s0 + $0x50] sm:$0xff]
  %v128 = vld [vmem:[%s0 + $0x58] sm:$0xff]
  %v129 = vld [vmem:[%s0 + $0x60] sm:$0xff]
  %v130 = vld [vmem:[%s0 + $0x68] sm:$0xff]
  %v131 = vld [vmem:[%s0 + $0x70] sm:$0xff]
  %v132 = vld [vmem:[%s0 + $0x78] sm:$0xff]
  %v133 = vld [vmem:[%s0 + $0x80] sm:$0xff]
  %v134 = vld [vmem:[%s0 + $0x88] sm:$0xff]
  %v135 = vld [vmem:[%s0 + $0x90] sm:$0xff]
  %v136 = vld [vmem:[%s0 + $0x98] sm:$0xff]
  %v137 = vld [vmem:[%s0 + $0xa0] sm:$0xff]
  %v138 = vld [vmem:[%s0 + $0xa8] sm:$0xff]
  %v139 = vld [vmem:[%s0 + $0xb0] sm:$0xff]
  %v140 = vld [vmem:[%s0 + $0xb8] sm:$0xff]
  %v141 = vld [vmem:[%s0 + $0xc0] sm:$0xff]
  %v142 = vld [vmem:[%s0 + $0xc8] sm:$0xff]
  %v143 = vld [vmem:[%s0 + $0xd0] sm:$0xff]
  %v144 = vld [vmem:[%s0 + $0xd8] sm:$0xff]
  %v145 = vld [vmem:[%s0 + $0xe0] sm:$0xff]
  %v146 = vld [vmem:[%s0 + $0xe8] sm:$0xff]
  %v147 = vld [vmem:[%s0 + $0xf0] sm:$0xff]
  %v148 = vld [vmem:[%s0 + $0xf8] sm:$0xff]
  %v149 = vld [vmem:[%s0 + $0x100] sm:$0xff]
  %v150 = vld [vmem:[%s0 + $0x108] sm:$0xff]
  %v151 = vld [vmem:[%s0 + $0x110] sm:$0xff]
  %v152 = vld [vmem:[%s0 + $0x118] sm:$0xff]
  %v153 = vld [vmem:[%s0 + $0x120] sm:$0xff]
  %v154 = vld [vmem:[%s0 + $0x128] sm:$0xff]
  %v155 = vld [vmem:[%s0 + $0x130] sm:$0xff]
  %v156 = vld [vmem:[%s0 + $0x138] sm:$0xff]
  %v157 = vld [vmem:[%s0 + $0x140] sm:$0xff]
  %v158 = vld [vmem:[%s0 + $0x148] sm:$0xff]
  %v159 = vld [vmem:[%s0 + $0x150] sm:$0xff]
  %v160 = vld [vmem:[%s0 + $0x158] sm:$0xff]
  %v161 = vld [vmem:[%s0 + $0x160] sm:$0xff]
  %v162 = vld [vmem:[%s0 + $0x168] sm:$0xff]
  %v163 = vld [vmem:[%s0 + $0x170] sm:$0xff]
  %v164 = vld [vmem:[%s0 + $0x178] sm:$0xff]
  %v165 = vld [vmem:[%s0 + $0x180] sm:$0xff]
  %v166 = vld [vmem:[%s0 + $0x188] sm:$0xff]
  %v167 = vld [vmem:[%s1] sm:$0xff]
  %v168 = vld [vmem:[%s1 + $0x8] sm:$0xff]
  %v169 = vld [vmem:[%s1 + $0x10] sm:$0xff]
  %v170 = vld [vmem:[%s1 + $0x18] sm:$0xff]
  %v171 = vld [vmem:[%s1 + $0x20] sm:$0xff]
  %v172 = vld [vmem:[%s1 + $0x28] sm:$0xff]
  %v173 = vld [vmem:[%s1 + $0x30] sm:$0xff]
  %v174 = vld [vmem:[%s1 + $0x38] sm:$0xff]
  %v175 = vld [vmem:[%s1 + $0x40] sm:$0xff]
  %v176 = vld [vmem:[%s1 + $0x48] sm:$0xff]
  %v177 = vld [vmem:[%s1 + $0x50] sm:$0xff]
  %v178 = vld [vmem:[%s1 + $0x58] sm:$0xff]
  %v179 = vld [vmem:[%s1 + $0x60] sm:$0xff]
  %v180 = vld [vmem:[%s1 + $0x68] sm:$0xff]
  %v181 = vld [vmem:[%s1 + $0x70] sm:$0xff]
  %v182 = vld [vmem:[%s1 + $0x78] sm:$0xff]
  %183 = vmatpush.msra.mxu0 %v182
  %184 = vmatpush.msra.mxu0 %v181
  %185 = vmatpush.msra.mxu0 %v180
  %186 = vmatpush.msra.mxu0 %v179
  %187 = vmatpush.msra.mxu0 %v178
  %188 = vmatpush.msra.mxu0 %v177
  %189 = vmatpush.msra.mxu0 %v176
  %190 = vmatpush.msra.mxu0 %v175
  %191 = vmatpush.msra.mxu0 %v174
  %192 = vmatpush.msra.mxu0 %v173
  %193 = vmatpush.msra.mxu0 %v172
  %194 = vmatpush.msra.mxu0 %v171
  %195 = vmatpush.msra.mxu0 %v170
  %196 = vmatpush.msra.mxu0 %v169
  %197 = vmatpush.msra.mxu0 %v168
  %198 = vmatpush.msra.mxu0 %v167
  %199 = vmatmul.f32.gmra.mxu0 %v117
  %v200 = vpop.f32.mrf.mxu0
  %v201 = vadd.f32 0.0, %v200
  %202 = vmatmul.f32.gmra.mxu0 %v118
  %v203 = vpop.f32.mrf.mxu0
  %v204 = vadd.f32 0.0, %v203
  %205 = vmatmul.f32.gmra.mxu0 %v119
  %v206 = vpop.f32.mrf.mxu0
  %v207 = vadd.f32 0.0, %v206
  %208 = vmatmul.f32.gmra.mxu0 %v120
  %v209 = vpop.f32.mrf.mxu0
  %v210 = vadd.f32 0.0, %v209
  %211 = vmatmul.f32.gmra.mxu0 %v121
  %v212 = vpop.f32.mrf.mxu0
  %v213 = vadd.f32 0.0, %v212
  %214 = vmatmul.f32.gmra.mxu0 %v122
  %v215 = vpop.f32.mrf.mxu0
  %v216 = vadd.f32 0.0, %v215
  %217 = vmatmul.f32.gmra.mxu0 %v123
  %v218 = vpop.f32.mrf.mxu0
  %v219 = vadd.f32 0.0, %v218
  %220 = vmatmul.f32.gmra.mxu0 %v124
  %v221 = vpop.f32.mrf.mxu0
  %v222 = vadd.f32 0.0, %v221
  %223 = vmatmul.f32.gmra.mxu0 %v125
  %v224 = vpop.f32.mrf.mxu0
  %v225 = vadd.f32 0.0, %v224
  %226 = vmatmul.f32.gmra.mxu0 %v126
  %v227 = vpop.f32.mrf.mxu0
  %v228 = vadd.f32 0.0, %v227
  %229 = vmatmul.f32.gmra.mxu0 %v127
  %v230 = vpop.f32.mrf.mxu0
  %v231 = vadd.f32 0.0, %v230
  %232 = vmatmul.f32.gmra.mxu0 %v128
  %v233 = vpop.f32.mrf.mxu0
  %v234 = vadd.f32 0.0, %v233
  %235 = vmatmul.f32.gmra.mxu0 %v129
  %v236 = vpop.f32.mrf.mxu0
  %v237 = vadd.f32 0.0, %v236
  %238 = vmatmul.f32.gmra.mxu0 %v130
  %v239 = vpop.f32.mrf.mxu0
  %v240 = vadd.f32 0.0, %v239
  %241 = vmatmul.f32.gmra.mxu0 %v131
  %v242 = vpop.f32.mrf.mxu0
  %v243 = vadd.f32 0.0, %v242
  %244 = vmatmul.f32.gmra.mxu0 %v132
  %v245 = vpop.f32.mrf.mxu0
  %v246 = vadd.f32 0.0, %v245
  %247 = vmatmul.f32.gmra.mxu0 %v133
  %v248 = vpop.f32.mrf.mxu0
  %v249 = vadd.f32 0.0, %v248
  %250 = vmatmul.f32.gmra.mxu0 %v134
  %v251 = vpop.f32.mrf.mxu0
  %v252 = vadd.f32 0.0, %v251
  %253 = vmatmul.f32.gmra.mxu0 %v135
  %v254 = vpop.f32.mrf.mxu0
  %v255 = vadd.f32 0.0, %v254
  %256 = vmatmul.f32.gmra.mxu0 %v136
  %v257 = vpop.f32.mrf.mxu0
  %v258 = vadd.f32 0.0, %v257
  %259 = vmatmul.f32.gmra.mxu0 %v137
  %v260 = vpop.f32.mrf.mxu0
  %v261 = vadd.f32 0.0, %v260
  %262 = vmatmul.f32.gmra.mxu0 %v138
  %v263 = vpop.f32.mrf.mxu0
  %v264 = vadd.f32 0.0, %v263
  %265 = vmatmul.f32.gmra.mxu0 %v139
  %v266 = vpop.f32.mrf.mxu0
  %v267 = vadd.f32 0.0, %v266
  %268 = vmatmul.f32.gmra.mxu0 %v140
  %v269 = vpop.f32.mrf.mxu0
  %v270 = vadd.f32 0.0, %v269
  %271 = vmatmul.f32.gmra.mxu0 %v141
  %v272 = vpop.f32.mrf.mxu0
  %v273 = vadd.f32 0.0, %v272
  %274 = vmatmul.f32.gmra.mxu0 %v142
  %v275 = vpop.f32.mrf.mxu0
  %v276 = vadd.f32 0.0, %v275
  %277 = vmatmul.f32.gmra.mxu0 %v143
  %v278 = vpop.f32.mrf.mxu0
  %v279 = vadd.f32 0.0, %v278
  %280 = vmatmul.f32.gmra.mxu0 %v144
  %v281 = vpop.f32.mrf.mxu0
  %v282 = vadd.f32 0.0, %v281
  %283 = vmatmul.f32.gmra.mxu0 %v145
  %v284 = vpop.f32.mrf.mxu0
  %v285 = vadd.f32 0.0, %v284
  %286 = vmatmul.f32.gmra.mxu0 %v146
  %v287 = vpop.f32.mrf.mxu0
  %v288 = vadd.f32 0.0, %v287
  %289 = vmatmul.f32.gmra.mxu0 %v147
  %v290 = vpop.f32.mrf.mxu0
  %v291 = vadd.f32 0.0, %v290
  %292 = vmatmul.f32.gmra.mxu0 %v148
  %v293 = vpop.f32.mrf.mxu0
  %v294 = vadd.f32 0.0, %v293
  %295 = vmatmul.f32.gmra.mxu0 %v149
  %v296 = vpop.f32.mrf.mxu0
  %v297 = vadd.f32 0.0, %v296
  %298 = vmatmul.f32.gmra.mxu0 %v150
  %v299 = vpop.f32.mrf.mxu0
  %v300 = vadd.f32 0.0, %v299
  %301 = vmatmul.f32.gmra.mxu0 %v151
  %v302 = vpop.f32.mrf.mxu0
  %v303 = vadd.f32 0.0, %v302
  %304 = vmatmul.f32.gmra.mxu0 %v152
  %v305 = vpop.f32.mrf.mxu0
  %v306 = vadd.f32 0.0, %v305
  %307 = vmatmul.f32.gmra.mxu0 %v153
  %v308 = vpop.f32.mrf.mxu0
  %v309 = vadd.f32 0.0, %v308
  %310 = vmatmul.f32.gmra.mxu0 %v154
  %v311 = vpop.f32.mrf.mxu0
  %v312 = vadd.f32 0.0, %v311
  %313 = vmatmul.f32.gmra.mxu0 %v155
  %v314 = vpop.f32.mrf.mxu0
  %v315 = vadd.f32 0.0, %v314
  %316 = vmatmul.f32.gmra.mxu0 %v156
  %v317 = vpop.f32.mrf.mxu0
  %v318 = vadd.f32 0.0, %v317
  %319 = vmatmul.f32.gmra.mxu0 %v157
  %v320 = vpop.f32.mrf.mxu0
  %v321 = vadd.f32 0.0, %v320
  %322 = vmatmul.f32.gmra.mxu0 %v158
  %v323 = vpop.f32.mrf.mxu0
  %v324 = vadd.f32 0.0, %v323
  %325 = vmatmul.f32.gmra.mxu0 %v159
  %v326 = vpop.f32.mrf.mxu0
  %v327 = vadd.f32 0.0, %v326
  %328 = vmatmul.f32.gmra.mxu0 %v160
  %v329 = vpop.f32.mrf.mxu0
  %v330 = vadd.f32 0.0, %v329
  %331 = vmatmul.f32.gmra.mxu0 %v161
  %v332 = vpop.f32.mrf.mxu0
  %v333 = vadd.f32 0.0, %v332
  %334 = vmatmul.f32.gmra.mxu0 %v162
  %v335 = vpop.f32.mrf.mxu0
  %v336 = vadd.f32 0.0, %v335
  %337 = vmatmul.f32.gmra.mxu0 %v163
  %v338 = vpop.f32.mrf.mxu0
  %v339 = vadd.f32 0.0, %v338
  %340 = vmatmul.f32.gmra.mxu0 %v164
  %v341 = vpop.f32.mrf.mxu0
  %v342 = vadd.f32 0.0, %v341
  %343 = vmatmul.f32.gmra.mxu0 %v165
  %v344 = vpop.f32.mrf.mxu0
  %v345 = vadd.f32 0.0, %v344
  %346 = vmatmul.f32.gmra.mxu0 %v166
  %v347 = vpop.f32.mrf.mxu0
  %v348 = vadd.f32 0.0, %v347
  %349 = vdwg.mxu0
  %v350 = vadd.f32 %v67, %v201
  %v351 = vadd.f32 %v68, %v204
  %v352 = vadd.f32 %v69, %v207
  %v353 = vadd.f32 %v70, %v210
  %v354 = vadd.f32 %v71, %v213
  %v355 = vadd.f32 %v72, %v216
  %v356 = vadd.f32 %v73, %v219
  %v357 = vadd.f32 %v74, %v222
  %v358 = vadd.f32 %v75, %v225
  %v359 = vadd.f32 %v76, %v228
  %v360 = vadd.f32 %v77, %v231
  %v361 = vadd.f32 %v78, %v234
  %v362 = vadd.f32 %v79, %v237
  %v363 = vadd.f32 %v80, %v240
  %v364 = vadd.f32 %v81, %v243
  %v365 = vadd.f32 %v82, %v246
  %v366 = vadd.f32 %v83, %v249
  %v367 = vadd.f32 %v84, %v252
  %v368 = vadd.f32 %v85, %v255
  %v369 = vadd.f32 %v86, %v258
  %v370 = vadd.f32 %v87, %v261
  %v371 = vadd.f32 %v88, %v264
  %v372 = vadd.f32 %v89, %v267
  %v373 = vadd.f32 %v90, %v270
  %v374 = vadd.f32 %v91, %v273
  %v375 = vadd.f32 %v92, %v276
  %v376 = vadd.f32 %v93, %v279
  %v377 = vadd.f32 %v94, %v282
  %v378 = vadd.f32 %v95, %v285
  %v379 = vadd.f32 %v96, %v288
  %v380 = vadd.f32 %v97, %v291
  %v381 = vadd.f32 %v98, %v294
  %v382 = vadd.f32 %v99, %v297
  %v383 = vadd.f32 %v100, %v300
  %v384 = vadd.f32 %v101, %v303
  %v385 = vadd.f32 %v102, %v306
  %v386 = vadd.f32 %v103, %v309
  %v387 = vadd.f32 %v104, %v312
  %v388 = vadd.f32 %v105, %v315
  %v389 = vadd.f32 %v106, %v318
  %v390 = vadd.f32 %v107, %v321
  %v391 = vadd.f32 %v108, %v324
  %v392 = vadd.f32 %v109, %v327
  %v393 = vadd.f32 %v110, %v330
  %v394 = vadd.f32 %v111, %v333
  %v395 = vadd.f32 %v112, %v336
  %v396 = vadd.f32 %v113, %v339
  %v397 = vadd.f32 %v114, %v342
  %v398 = vadd.f32 %v115, %v345
  %v399 = vadd.f32 %v116, %v348
  %400 = vst [vmem:[#allocation2] sm:$0xff] %v350
  %401 = vst [vmem:[#allocation2 + $0x8] sm:$0xff] %v351
  %402 = vst [vmem:[#allocation2 + $0x10] sm:$0xff] %v352
  %403 = vst [vmem:[#allocation2 + $0x18] sm:$0xff] %v353
  %404 = vst [vmem:[#allocation2 + $0x20] sm:$0xff] %v354
  %405 = vst [vmem:[#allocation2 + $0x28] sm:$0xff] %v355
  %406 = vst [vmem:[#allocation2 + $0x30] sm:$0xff] %v356
  %407 = vst [vmem:[#allocation2 + $0x38] sm:$0xff] %v357
  %408 = vst [vmem:[#allocation2 + $0x40] sm:$0xff] %v358
  %409 = vst [vmem:[#allocation2 + $0x48] sm:$0xff] %v359
  %410 = vst [vmem:[#allocation2 + $0x50] sm:$0xff] %v360
  %411 = vst [vmem:[#allocation2 + $0x58] sm:$0xff] %v361
  %412 = vst [vmem:[#allocation2 + $0x60] sm:$0xff] %v362
  %413 = vst [vmem:[#allocation2 + $0x68] sm:$0xff] %v363
  %414 = vst [vmem:[#allocation2 + $0x70] sm:$0xff] %v364
  %415 = vst [vmem:[#allocation2 + $0x78] sm:$0xff] %v365
  %416 = vst [vmem:[#allocation2 + $0x80] sm:$0xff] %v366
  %417 = vst [vmem:[#allocation2 + $0x88] sm:$0xff] %v367
  %418 = vst [vmem:[#allocation2 + $0x90] sm:$0xff] %v368
  %419 = vst [vmem:[#allocation2 + $0x98] sm:$0xff] %v369
  %420 = vst [vmem:[#allocation2 + $0xa0] sm:$0xff] %v370
  %421 = vst [vmem:[#allocation2 + $0xa8] sm:$0xff] %v371
  %422 = vst [vmem:[#allocation2 + $0xb0] sm:$0xff] %v372
  %423 = vst [vmem:[#allocation2 + $0xb8] sm:$0xff] %v373
  %424 = vst [vmem:[#allocation2 + $0xc0] sm:$0xff] %v374
  %425 = vst [vmem:[#allocation2 + $0xc8] sm:$0xff] %v375
  %426 = vst [vmem:[#allocation2 + $0xd0] sm:$0xff] %v376
  %427 = vst [vmem:[#allocation2 + $0xd8] sm:$0xff] %v377
  %428 = vst [vmem:[#allocation2 + $0xe0] sm:$0xff] %v378
  %429 = vst [vmem:[#allocation2 + $0xe8] sm:$0xff] %v379
  %430 = vst [vmem:[#allocation2 + $0xf0] sm:$0xff] %v380
  %431 = vst [vmem:[#allocation2 + $0xf8] sm:$0xff] %v381
  %432 = vst [vmem:[#allocation2 + $0x100] sm:$0xff] %v382
  %433 = vst [vmem:[#allocation2 + $0x108] sm:$0xff] %v383
  %434 = vst [vmem:[#allocation2 + $0x110] sm:$0xff] %v384
  %435 = vst [vmem:[#allocation2 + $0x118] sm:$0xff] %v385
  %436 = vst [vmem:[#allocation2 + $0x120] sm:$0xff] %v386
  %437 = vst [vmem:[#allocation2 + $0x128] sm:$0xff] %v387
  %438 = vst [vmem:[#allocation2 + $0x130] sm:$0xff] %v388
  %439 = vst [vmem:[#allocation2 + $0x138] sm:$0xff] %v389
  %440 = vst [vmem:[#allocation2 + $0x140] sm:$0xff] %v390
  %441 = vst [vmem:[#allocation2 + $0x148] sm:$0xff] %v391
  %442 = vst [vmem:[#allocation2 + $0x150] sm:$0xff] %v392
  %443 = vst [vmem:[#allocation2 + $0x158] sm:$0xff] %v393
  %444 = vst [vmem:[#allocation2 + $0x160] sm:$0xff] %v394
  %445 = vst [vmem:[#allocation2 + $0x168] sm:$0xff] %v395
  %446 = vst [vmem:[#allocation2 + $0x170] sm:$0xff] %v396
  %447 = vst [vmem:[#allocation2 + $0x178] sm:$0xff] %v397
  %448 = vst [vmem:[#allocation2 + $0x180] sm:$0xff] %v398
  %449 = vst [vmem:[#allocation2 + $0x188] sm:$0xff] %v399
  // Predicated region
  $region14: #{complex_single_conv_block.1} parent=0 // pred_check
    %p450 = pneg %p13
  $region15: #{complex_single_conv_block.1} parent=0 // pred_check_branch
    %452 = sbr.rel (%p450) target = $region17
  $region16: #{complex_single_conv_block.1} parent=0 // pred_region
    %v453 = vld [vmem:[#allocation2] sm:$0xff]
    %v454 = vld [vmem:[#allocation2 + $0x8] sm:$0xff]
    %v455 = vld [vmem:[#allocation2 + $0x10] sm:$0xff]
    %v456 = vld [vmem:[#allocation2 + $0x18] sm:$0xff]
    %v457 = vld [vmem:[#allocation2 + $0x20] sm:$0xff]
    %v458 = vld [vmem:[#allocation2 + $0x28] sm:$0xff]
    %v459 = vld [vmem:[#allocation2 + $0x30] sm:$0xff]
    %v460 = vld [vmem:[#allocation2 + $0x38] sm:$0xff]
    %v461 = vld [vmem:[#allocation2 + $0x40] sm:$0xff]
    %v462 = vld [vmem:[#allocation2 + $0x48] sm:$0xff]
    %v463 = vld [vmem:[#allocation2 + $0x50] sm:$0xff]
    %v464 = vld [vmem:[#allocation2 + $0x58] sm:$0xff]
    %v465 = vld [vmem:[#allocation2 + $0x60] sm:$0xff]
    %v466 = vld [vmem:[#allocation2 + $0x68] sm:$0xff]
    %v467 = vld [vmem:[#allocation2 + $0x70] sm:$0xff]
    %v468 = vld [vmem:[#allocation2 + $0x78] sm:$0xff]
    %v469 = vld [vmem:[#allocation2 + $0x80] sm:$0xff]
    %v470 = vld [vmem:[#allocation2 + $0x88] sm:$0xff]
    %v471 = vld [vmem:[#allocation2 + $0x90] sm:$0xff]
    %v472 = vld [vmem:[#allocation2 + $0x98] sm:$0xff]
    %v473 = vld [vmem:[#allocation2 + $0xa0] sm:$0xff]
    %v474 = vld [vmem:[#allocation2 + $0xa8] sm:$0xff]
    %v475 = vld [vmem:[#allocation2 + $0xb0] sm:$0xff]
    %v476 = vld [vmem:[#allocation2 + $0xb8] sm:$0xff]
    %v477 = vld [vmem:[#allocation2 + $0xc0] sm:$0xff]
    %v478 = vld [vmem:[#allocation2 + $0xc8] sm:$0xff]
    %v479 = vld [vmem:[#allocation2 + $0xd0] sm:$0xff]
    %v480 = vld [vmem:[#allocation2 + $0xd8] sm:$0xff]
    %v481 = vld [vmem:[#allocation2 + $0xe0] sm:$0xff]
    %v482 = vld [vmem:[#allocation2 + $0xe8] sm:$0xff]
    %v483 = vld [vmem:[#allocation2 + $0xf0] sm:$0xff]
    %v484 = vld [vmem:[#allocation2 + $0xf8] sm:$0xff]
    %v485 = vld [vmem:[#allocation2 + $0x100] sm:$0xff]
    %v486 = vld [vmem:[#allocation2 + $0x108] sm:$0xff]
    %v487 = vld [vmem:[#allocation2 + $0x110] sm:$0xff]
    %v488 = vld [vmem:[#allocation2 + $0x118] sm:$0xff]
    %v489 = vld [vmem:[#allocation2 + $0x120] sm:$0xff]
    %v490 = vld [vmem:[#allocation2 + $0x128] sm:$0xff]
    %v491 = vld [vmem:[#allocation2 + $0x130] sm:$0xff]
    %v492 = vld [vmem:[#allocation2 + $0x138] sm:$0xff]
    %v493 = vld [vmem:[#allocation2 + $0x140] sm:$0xff]
    %v494 = vld [vmem:[#allocation2 + $0x148] sm:$0xff]
    %v495 = vld [vmem:[#allocation2 + $0x150] sm:$0xff]
    %v496 = vld [vmem:[#allocation2 + $0x158] sm:$0xff]
    %v497 = vld [vmem:[#allocation2 + $0x160] sm:$0xff]
    %v498 = vld [vmem:[#allocation2 + $0x168] sm:$0xff]
    %v499 = vld [vmem:[#allocation2 + $0x170] sm:$0xff]
    %v500 = vld [vmem:[#allocation2 + $0x178] sm:$0xff]
    %v501 = vld [vmem:[#allocation2 + $0x180] sm:$0xff]
    %v502 = vld [vmem:[#allocation2 + $0x188] sm:$0xff]
    %503 = vst [vmem:[%s2] sm:$0xff] %v453
    %504 = vst [vmem:[%s2 + $0x8] sm:$0xff] %v454
    %505 = vst [vmem:[%s2 + $0x10] sm:$0xff] %v455
    %506 = vst [vmem:[%s2 + $0x18] sm:$0xff] %v456
    %507 = vst [vmem:[%s2 + $0x20] sm:$0xff] %v457
    %508 = vst [vmem:[%s2 + $0x28] sm:$0xff] %v458
    %509 = vst [vmem:[%s2 + $0x30] sm:$0xff] %v459
    %510 = vst [vmem:[%s2 + $0x38] sm:$0xff] %v460
    %511 = vst [vmem:[%s2 + $0x40] sm:$0xff] %v461
    %512 = vst [vmem:[%s2 + $0x48] sm:$0xff] %v462
    %513 = vst [vmem:[%s2 + $0x50] sm:$0xff] %v463
    %514 = vst [vmem:[%s2 + $0x58] sm:$0xff] %v464
    %515 = vst [vmem:[%s2 + $0x60] sm:$0xff] %v465
    %516 = vst [vmem:[%s2 + $0x68] sm:$0xff] %v466
    %517 = vst [vmem:[%s2 + $0x70] sm:$0xff] %v467
    %518 = vst [vmem:[%s2 + $0x78] sm:$0xff] %v468
    %519 = vst [vmem:[%s2 + $0x80] sm:$0xff] %v469
    %520 = vst [vmem:[%s2 + $0x88] sm:$0xff] %v470
    %521 = vst [vmem:[%s2 + $0x90] sm:$0xff] %v471
    %522 = vst [vmem:[%s2 + $0x98] sm:$0xff] %v472
    %523 = vst [vmem:[%s2 + $0xa0] sm:$0xff] %v473
    %524 = vst [vmem:[%s2 + $0xa8] sm:$0xff] %v474
    %525 = vst [vmem:[%s2 + $0xb0] sm:$0xff] %v475
    %526 = vst [vmem:[%s2 + $0xb8] sm:$0xff] %v476
    %527 = vst [vmem:[%s2 + $0xc0] sm:$0xff] %v477
    %528 = vst [vmem:[%s2 + $0xc8] sm:$0xff] %v478
    %529 = vst [vmem:[%s2 + $0xd0] sm:$0xff] %v479
    %530 = vst [vmem:[%s2 + $0xd8] sm:$0xff] %v480
    %531 = vst [vmem:[%s2 + $0xe0] sm:$0xff] %v481
    %532 = vst [vmem:[%s2 + $0xe8] sm:$0xff] %v482
    %533 = vst [vmem:[%s2 + $0xf0] sm:$0xff] %v483
    %534 = vst [vmem:[%s2 + $0xf8] sm:$0xff] %v484
    %535 = vst [vmem:[%s2 + $0x100] sm:$0xff] %v485
    %536 = vst [vmem:[%s2 + $0x108] sm:$0xff] %v486
    %537 = vst [vmem:[%s2 + $0x110] sm:$0xff] %v487
    %538 = vst [vmem:[%s2 + $0x118] sm:$0xff] %v488
    %539 = vst [vmem:[%s2 + $0x120] sm:$0xff] %v489
    %540 = vst [vmem:[%s2 + $0x128] sm:$0xff] %v490
    %541 = vst [vmem:[%s2 + $0x130] sm:$0xff] %v491
    %542 = vst [vmem:[%s2 + $0x138] sm:$0xff] %v492
    %543 = vst [vmem:[%s2 + $0x140] sm:$0xff] %v493
    %544 = vst [vmem:[%s2 + $0x148] sm:$0xff] %v494
    %545 = vst [vmem:[%s2 + $0x150] sm:$0xff] %v495
    %546 = vst [vmem:[%s2 + $0x158] sm:$0xff] %v496
    %547 = vst [vmem:[%s2 + $0x160] sm:$0xff] %v497
    %548 = vst [vmem:[%s2 + $0x168] sm:$0xff] %v498
    %549 = vst [vmem:[%s2 + $0x170] sm:$0xff] %v499
    %550 = vst [vmem:[%s2 + $0x178] sm:$0xff] %v500
    %551 = vst [vmem:[%s2 + $0x180] sm:$0xff] %v501
    %552 = vst [vmem:[%s2 + $0x188] sm:$0xff] %v502
    %v553 = vadd.f32 %v453, %v454
    %v554 = vadd.f32 %v553, %v455
    %v555 = vadd.f32 %v554, %v456
    %v556 = vadd.f32 %v555, %v457
    %v557 = vadd.f32 %v556, %v458
    %v558 = vadd.f32 %v557, %v459
    %v559 = vadd.f32 %v558, %v460
    %v560 = vadd.f32 %v559, %v461
    %v561 = vadd.f32 %v560, %v462
    %v562 = vadd.f32 %v561, %v463
    %v563 = vadd.f32 %v562, %v464
    %v564 = vadd.f32 %v563, %v465
    %v565 = vadd.f32 %v564, %v466
    %v566 = vadd.f32 %v565, %v467
    %v567 = vadd.f32 %v566, %v468
    %v568 = vadd.f32 %v567, %v469
    %v569 = vadd.f32 %v568, %v470
    %v570 = vadd.f32 %v569, %v471
    %v571 = vadd.f32 %v570, %v472
    %v572 = vadd.f32 %v571, %v473
    %v573 = vadd.f32 %v572, %v474
    %v574 = vadd.f32 %v573, %v475
    %v575 = vadd.f32 %v574, %v476
    %v576 = vadd.f32 %v575, %v477
    %v577 = vadd.f32 %v576, %v478
    %v578 = vadd.f32 %v577, %v479
    %v579 = vadd.f32 %v578, %v480
    %v580 = vadd.f32 %v579, %v481
    %v581 = vadd.f32 %v580, %v482
    %v582 = vadd.f32 %v581, %v483
    %v583 = vadd.f32 %v582, %v484
    %v584 = vadd.f32 %v583, %v485
    %v585 = vadd.f32 %v584, %v486
    %v586 = vadd.f32 %v585, %v487
    %v587 = vadd.f32 %v586, %v488
    %v588 = vadd.f32 %v587, %v489
    %v589 = vadd.f32 %v588, %v490
    %v590 = vadd.f32 %v589, %v491
    %v591 = vadd.f32 %v590, %v492
    %v592 = vadd.f32 %v591, %v493
    %v593 = vadd.f32 %v592, %v494
    %v594 = vadd.f32 %v593, %v495
    %v595 = vadd.f32 %v594, %v496
    %v596 = vadd.f32 %v595, %v497
    %v597 = vadd.f32 %v596, %v498
    %v598 = vadd.f32 %v597, %v499
    %v599 = vadd.f32 %v598, %v500
    %v600 = vadd.f32 %v599, %v501
    %v601 = vadd.f32 %v600, %v502
    %v602 = vrot.slane %v601, 4
    %v603 = vadd.f32 %v601, %v602
    %v604 = vrot.slane %v603, 2
    %v605 = vadd.f32 %v603, %v604
    %v606 = vrot.slane %v605, 1
    %v607 = vadd.f32 %v605, %v606
    %608 = vst [vmem:[%s3] sm:$0x1] %v607
    %v609 = vmul.f32 %v453, %v453
    %v610 = vmul.f32 %v454, %v454
    %v611 = vmul.f32 %v455, %v455
    %v612 = vmul.f32 %v456, %v456
    %v613 = vmul.f32 %v457, %v457
    %v614 = vmul.f32 %v458, %v458
    %v615 = vmul.f32 %v459, %v459
    %v616 = vmul.f32 %v460, %v460
    %v617 = vmul.f32 %v461, %v461
    %v618 = vmul.f32 %v462, %v462
    %v619 = vmul.f32 %v463, %v463
    %v620 = vmul.f32 %v464, %v464
    %v621 = vmul.f32 %v465, %v465
    %v622 = vmul.f32 %v466, %v466
    %v623 = vmul.f32 %v467, %v467
    %v624 = vmul.f32 %v468, %v468
    %v625 = vmul.f32 %v469, %v469
    %v626 = vmul.f32 %v470, %v470
    %v627 = vmul.f32 %v471, %v471
    %v628 = vmul.f32 %v472, %v472
    %v629 = vmul.f32 %v473, %v473
    %v630 = vmul.f32 %v474, %v474
    %v631 = vmul.f32 %v475, %v475
    %v632 = vmul.f32 %v476, %v476
    %v633 = vmul.f32 %v477, %v477
    %v634 = vmul.f32 %v478, %v478
    %v635 = vmul.f32 %v479, %v479
    %v636 = vmul.f32 %v480, %v480
    %v637 = vmul.f32 %v481, %v481
    %v638 = vmul.f32 %v482, %v482
    %v639 = vmul.f32 %v483, %v483
    %v640 = vmul.f32 %v484, %v484
    %v641 = vmul.f32 %v485, %v485
    %v642 = vmul.f32 %v486, %v486
    %v643 = vmul.f32 %v487, %v487
    %v644 = vmul.f32 %v488, %v488
    %v645 = vmul.f32 %v489, %v489
    %v646 = vmul.f32 %v490, %v490
    %v647 = vmul.f32 %v491, %v491
    %v648 = vmul.f32 %v492, %v492
    %v649 = vmul.f32 %v493, %v493
    %v650 = vmul.f32 %v494, %v494
    %v651 = vmul.f32 %v495, %v495
    %v652 = vmul.f32 %v496, %v496
    %v653 = vmul.f32 %v497, %v497
    %v654 = vmul.f32 %v498, %v498
    %v655 = vmul.f32 %v499, %v499
    %v656 = vmul.f32 %v500, %v500
    %v657 = vmul.f32 %v501, %v501
    %v658 = vmul.f32 %v502, %v502
    %v659 = vadd.f32 %v609, %v610
    %v660 = vadd.f32 %v659, %v611
    %v661 = vadd.f32 %v660, %v612
    %v662 = vadd.f32 %v661, %v613
    %v663 = vadd.f32 %v662, %v614
    %v664 = vadd.f32 %v663, %v615
    %v665 = vadd.f32 %v664, %v616
    %v666 = vadd.f32 %v665, %v617
    %v667 = vadd.f32 %v666, %v618
    %v668 = vadd.f32 %v667, %v619
    %v669 = vadd.f32 %v668, %v620
    %v670 = vadd.f32 %v669, %v621
    %v671 = vadd.f32 %v670, %v622
    %v672 = vadd.f32 %v671, %v623
    %v673 = vadd.f32 %v672, %v624
    %v674 = vadd.f32 %v673, %v625
    %v675 = vadd.f32 %v674, %v626
    %v676 = vadd.f32 %v675, %v627
    %v677 = vadd.f32 %v676, %v628
    %v678 = vadd.f32 %v677, %v629
    %v679 = vadd.f32 %v678, %v630
    %v680 = vadd.f32 %v679, %v631
    %v681 = vadd.f32 %v680, %v632
    %v682 = vadd.f32 %v681, %v633
    %v683 = vadd.f32 %v682, %v634
    %v684 = vadd.f32 %v683, %v635
    %v685 = vadd.f32 %v684, %v636
    %v686 = vadd.f32 %v685, %v637
    %v687 = vadd.f32 %v686, %v638
    %v688 = vadd.f32 %v687, %v639
    %v689 = vadd.f32 %v688, %v640
    %v690 = vadd.f32 %v689, %v641
    %v691 = vadd.f32 %v690, %v642
    %v692 = vadd.f32 %v691, %v643
    %v693 = vadd.f32 %v692, %v644
    %v694 = vadd.f32 %v693, %v645
    %v695 = vadd.f32 %v694, %v646
    %v696 = vadd.f32 %v695, %v647
    %v697 = vadd.f32 %v696, %v648
    %v698 = vadd.f32 %v697, %v649
    %v699 = vadd.f32 %v698, %v650
    %v700 = vadd.f32 %v699, %v651
    %v701 = vadd.f32 %v700, %v652
    %v702 = vadd.f32 %v701, %v653
    %v703 = vadd.f32 %v702, %v654
    %v704 = vadd.f32 %v703, %v655
    %v705 = vadd.f32 %v704, %v656
    %v706 = vadd.f32 %v705, %v657
    %v707 = vadd.f32 %v706, %v658
    %v708 = vrot.slane %v707, 4
    %v709 = vadd.f32 %v707, %v708
    %v710 = vrot.slane %v709, 2
    %v711 = vadd.f32 %v709, %v710
    %v712 = vrot.slane %v711, 1
    %v713 = vadd.f32 %v711, %v712
    %714 = vst [vmem:[%s3 + $0x1] sm:$0x1] %v713
  $region17: #{complex_single_conv_block.1} parent=0 // pred_fallthru
    _
  // Predicated region
  $region18: #{complex_single_conv_block.1} parent=0 // pred_check
    _
  $region19: #{complex_single_conv_block.1} parent=0 // pred_check_branch
    %716 = sbr.rel (0) target = $region21
  $region20: #{complex_single_conv_block.1} parent=0 // pred_region
    _
  $region21: #{complex_single_conv_block.1} parent=0 // pred_fallthru
    _
  // Predicated region
  $region22: #{complex_single_conv_block.1} parent=0 // pred_check
    _
  $region23: #{complex_single_conv_block.1} parent=0 // pred_check_branch
    %718 = sbr.rel (0) target = $region25
  $region24: #{complex_single_conv_block.1} parent=0 // pred_region
    _
  $region25: #{complex_single_conv_block.1} parent=0 // pred_fallthru
    _
  // Predicated region
  $region26: #{complex_single_conv_block.1} parent=0 // pred_check
    _
  $region27: #{complex_single_conv_block.1} parent=0 // pred_check_branch
    %720 = sbr.rel (0) target = $region29
  $region28: #{complex_single_conv_block.1} parent=0 // pred_region
    _
  $region29: #{complex_single_conv_block.1} parent=0 // pred_fallthru
    _
  // Predicated region
  $region30: #{complex_single_conv_block.1} parent=0 // pred_check
    _
  $region31: #{complex_single_conv_block.1} parent=0 // pred_check_branch
    %722 = sbr.rel (0) target = $region33
  $region32: #{complex_single_conv_block.1} parent=0 // pred_region
    _
  $region33: #{complex_single_conv_block.1} parent=0 // pred_fallthru
    _

</llo_original>
